<compile_context>
chip_gen: v7x
topology: tpu7x:2x2x1
jax: 0.10.0
libtpu: 0.0.40
codegen_flags: <defaults>
</compile_context>

<pallas_src>
import functools
import math

import jax
import jax.numpy as jnp
from jax.experimental import pallas as pl
from jax.experimental.pallas import tpu as pltpu


def _round_up(x, m):
    return ((x + m - 1) // m) * m


def _largest_dividing_tile(dim, max_tile, step=128):
    """Largest multiple of `step` <= max_tile that divides `dim` (dim % step == 0)."""
    t = max(step, (min(max_tile, dim) // step) * step)
    while t > step and dim % t:
        t -= step
    return t


def _vmem_budget_bytes():
    """~70% of this generation's VMEM (v5e/v6e: 128 MiB, v7x: 64 MiB per core)."""
    try:
        cap = int(pltpu.get_tpu_info().vmem_capacity_bytes)
    except Exception:
        cap = 64 << 20  # conservative fallback = v7x per-core VMEM
    return max(32 << 20, int(0.70 * cap))


# ---------------------------------------------------------------------------
# Kernel 1: support = x @ W, emitted as `compute_dtype` (bf16) in the padded
# [Np, Fp] layout the second matmul consumes.  in_features is consumed as one
# full-extent block (no K grid) -> single store, no zero-init, no zero-bias.
# ---------------------------------------------------------------------------
def _support_kernel(x_ref, w_ref, o_ref):
    o_ref[...] = jnp.dot(
        x_ref[...], w_ref[...], preferred_element_type=jnp.float32
    ).astype(o_ref.dtype)


def _compute_support(x, weight, Np, Fp, out_dtype, vmem_budget):
    """x @ weight as `out_dtype`, shape [Np, Fp]; rows >= N / cols >= out_f are 0."""
    N, in_f = x.shape
    out_f = weight.shape[1]
    if Np != N:
        # x is tiny next to adj; padding it keeps the K padding of `support`
        # exactly zero (required for exact accumulation in the adj matmul).
        x = jnp.pad(x, ((0, Np - N), (0, 0)))
    if Fp != out_f:
        weight = jnp.pad(weight, ((0, 0), (0, Fp - out_f)))

    if Np % 128 == 0:
        tm = _largest_dividing_tile(Np, 512)
    else:
        tm = Np  # small-N path: one full-dim row block (always layout-legal)
    # TODO(synk): tile in_features / out_features too if they ever get so large
    # that a (tm, in_f) f32 block no longer fits the VMEM budget.

    return pl.pallas_call(
        _support_kernel,
        out_shape=jax.ShapeDtypeStruct((Np, Fp), out_dtype),
        grid_spec=pltpu.PrefetchScalarGridSpec(
            num_scalar_prefetch=0,
            grid=(Np // tm,),
            in_specs=[
                pl.BlockSpec((tm, in_f), lambda i: (i, 0)),
                pl.BlockSpec((in_f, Fp), lambda i: (0, 0)),
            ],
            out_specs=pl.BlockSpec((tm, Fp), lambda i: (i, 0)),
        ),
        compiler_params=pltpu.CompilerParams(
            dimension_semantics=("parallel",),
            vmem_limit_bytes=vmem_budget,
        ),
    )(x, weight)


# ---------------------------------------------------------------------------
# Kernel 2: output = adj @ support (+ bias).  adj stays f32 in HBM (cast
# in-kernel); support is VMEM-resident across K; bias add fused on last step.
# ---------------------------------------------------------------------------
def _make_adj_kernel(*, nk, tk, k_valid, compute_dtype, sup_resident, has_bias):
    def kernel(adj_ref, sup_ref, *rest):
        if has_bias:
            bias_ref, o_ref = rest
        else:
            (o_ref,) = rest
            bias_ref = None

        k = pl.program_id(2)

        a = adj_ref[...]  # f32, straight from HBM (no wrapper cast/pad pass)
        if k_valid is not None:
            # Ragged last K tile: zero the columns >= N so stale edge-block
            # data cannot contaminate valid output rows.
            col = jax.lax.broadcasted_iota(jnp.int32, a.shape, 1) + k * tk
            a = jnp.where(col < k_valid, a, 0.0)
        a = a.astype(compute_dtype)  # in-kernel cast: 4 B/elem HBM read, once

        if sup_resident and nk > 1:
            off = pl.multiple_of(k * tk, tk)
            b = sup_ref[pl.ds(off, tk), :]  # slice the resident support block
        else:
            b = sup_ref[...]

        acc = jnp.dot(a, b, preferred_element_type=jnp.float32)

        if nk == 1:
            # Single K step: one store, bias fused — no pl.when at all.
            if has_bias:
                o_ref[...] = acc + bias_ref[...]
            else:
                o_ref[...] = acc
        else:
            # Write-on-first-k instead of zero-init + accumulate.
            @pl.when(k == 0)
            def _():
                o_ref[...] = acc

            @pl.when(k > 0)
            def _():
                o_ref[...] += acc

            if has_bias:
                @pl.when(k == nk - 1)
                def _():
                    o_ref[...] += bias_ref[...]

    return kernel


def _adj_matmul(adj, support, bias, *, tk, nk, k_valid, out_f, compute_dtype,
                vmem_budget, tm_max=512, tn_max=1024):
    """output = adj @ support (+ bias) as f32 [N, out_f].

    adj is [N, N] f32 and is consumed in place (never copied, cast or padded).
    support is [nk*tk, Fp] `compute_dtype` with exact zeros in its padded rows.
    """
    N = adj.shape[0]
    Np, Fp = support.shape
    sup_bytes = jnp.dtype(compute_dtype).itemsize

    tn = _largest_dividing_tile(Fp, tn_max)
    if nk == 1:
        # Small node count: full-dim blocks on the node axis (always legal),
        # so no padding, masking or partial blocks anywhere.
        tm = N
    else:
        # Large node count: 512-row adj tiles; edge row/output blocks may be
        # partial (Pallas masks OOB reads/writes), and any garbage only reaches
        # output rows >= N which out_shape excludes.
        tm = tm_max
    grid = (pl.cdiv(N, tm), Fp // tn, nk)

    # Keep support VMEM-resident across the whole contraction unless too big;
    # otherwise fall back to streaming (tk, tn) blocks.
    sup_resident = 2 * Np * tn * sup_bytes <= vmem_budget // 3
    if sup_resident:
        sup_spec = pl.BlockSpec((Np, tn), lambda i, j, k: (0, j))
    else:
        sup_spec = pl.BlockSpec((tk, tn), lambda i, j, k: (k, j))

    in_specs = [pl.BlockSpec((tm, tk), lambda i, j, k: (i, k)), sup_spec]
    operands = [adj, support]
    has_bias = bias is not None
    if has_bias:
        bias_row = bias.reshape(1, -1).astype(jnp.float32)
        if bias_row.shape[1] != Fp:
            bias_row = jnp.pad(bias_row, ((0, 0), (0, Fp - bias_row.shape[1])))
        in_specs.append(pl.BlockSpec((1, tn), lambda i, j, k: (0, j)))
        operands.append(bias_row)

    kernel = _make_adj_kernel(nk=nk, tk=tk, k_valid=k_valid,
                              compute_dtype=compute_dtype,
                              sup_resident=sup_resident, has_bias=has_bias)

    out = pl.pallas_call(
        kernel,
        out_shape=jax.ShapeDtypeStruct((N, Fp), jnp.float32),
        grid_spec=pltpu.PrefetchScalarGridSpec(
            num_scalar_prefetch=0,
            grid=grid,
            in_specs=in_specs,
            # Output block index is constant along the innermost (k) axis ->
            # it stays VMEM-resident and is accumulated into; k is "arbitrary".
            out_specs=pl.BlockSpec((tm, tn), lambda i, j, k: (i, j)),
        ),
        compiler_params=pltpu.CompilerParams(
            dimension_semantics=("parallel", "parallel", "arbitrary"),
            vmem_limit_bytes=vmem_budget,
        ),
    )(*operands)

    return out[:, :out_f] if Fp != out_f else out


def hgnn_conv_forward(x, adj, weight, bias=None, *,
                      compute_dtype=jnp.bfloat16, tk_max=1024):
    """HGNN_conv.forward: adj @ (x @ weight) (+ bias) -> f32 [N, out_features].

    compute_dtype controls the MXU operand precision of the adj matmul (and the
    storage dtype of `support`); pass jnp.float32 for a full-precision path.
    """
    N, in_f = x.shape
    assert adj.shape == (N, N), (adj.shape, x.shape)
    assert weight.shape[0] == in_f, (x.shape, weight.shape)
    out_f = weight.shape[1]
    Fp = _round_up(out_f, 128)
    vmem_budget = _vmem_budget_bytes()

    if _round_up(N, 128) <= tk_max:
        # Single K step over the node dimension: adj is consumed as one
        # full-width block (block dim == full array dim is always layout
        # legal), so nothing on the node axis is padded or masked.
        tk, nk, Np, k_valid = N, 1, N, None
    else:
        tk = tk_max                       # multiple of 128
        nk = (N + tk - 1) // tk
        Np = nk * tk                      # support rows (padded; pad rows are 0)
        k_valid = N if N % tk else None   # mask the ragged last K tile in-kernel

    support = _compute_support(x, weight, Np, Fp, compute_dtype, vmem_budget)
    return _adj_matmul(adj, support, bias, tk=tk, nk=nk, k_valid=k_valid,
                       out_f=out_f, compute_dtype=compute_dtype,
                       vmem_budget=vmem_budget)
    # TODO(synk): torch.sparse.mm uses a sparse adj; adj is handled densely
    # here.  A block-sparse version would scalar-prefetch per-row-tile nonzero
    # column offsets (PrefetchScalarGridSpec) and skip empty adj tiles, and the
    # two matmuls could be fused so `support` never touches HBM at all.


if __name__ == "__main__":
    # Small, non-tile-aligned shapes (exercise the padding-free full-dim path).
    N_nodes, in_features, out_features = 200, 96, 160

    key = jax.random.PRNGKey(0)
    kx, kadj, kw, kb = jax.random.split(key, 4)

    x = jax.random.normal(kx, (N_nodes, in_features), dtype=jnp.float32)
    adj = jax.random.uniform(kadj, (N_nodes, N_nodes), dtype=jnp.float32)

    # Parameter init matching reset_parameters(): uniform(-stdv, stdv),
    # stdv = 1 / sqrt(out_features).
    stdv = 1.0 / math.sqrt(out_features)
    weight = jax.random.uniform(kw, (in_features, out_features),
                                dtype=jnp.float32, minval=-stdv, maxval=stdv)
    bias = jax.random.uniform(kb, (out_features,), dtype=jnp.float32,
                              minval=-stdv, maxval=stdv)

    fwd = jax.jit(hgnn_conv_forward)
    out = jax.block_until_ready(fwd(x, adj, weight, bias))
    assert out.shape == (N_nodes, out_features)
    assert out.dtype == jnp.float32

    # Reference 1: matched precision (f32 support rounded to bf16, bf16 adj,
    # f32 accumulation) — mirrors what the kernels compute.
    support_match = jnp.dot(x, weight, precision="highest").astype(jnp.bfloat16)
    ref_match = jnp.dot(adj.astype(jnp.bfloat16), support_match,
                        preferred_element_type=jnp.float32) + bias
    assert jnp.allclose(out, ref_match, atol=2e-2, rtol=2e-2)

    # Reference 2: full f32 (loose tolerance — bf16 MXU operands in adj matmul).
    ref_f32 = jnp.dot(adj, jnp.dot(x, weight, precision="highest"),
                      precision="highest") + bias
    assert jnp.allclose(out, ref_f32, atol=1e-1, rtol=5e-2)

    # No-bias path (HGNN_conv(bias=False)).
    out_nb = jax.block_until_ready(jax.jit(hgnn_conv_forward)(x, adj, weight, None))
    assert jnp.allclose(out_nb + bias, out, atol=1e-5, rtol=1e-5)

    # Full-precision validation path via the compute_dtype flag.
    fwd_f32 = jax.jit(functools.partial(hgnn_conv_forward,
                                        compute_dtype=jnp.float32))
    out_f32 = jax.block_until_ready(fwd_f32(x, adj, weight, bias))
    assert jnp.allclose(out_f32, ref_f32, atol=2e-2, rtol=1e-2)

    print("KERNEL_OK")
</pallas_src>

<mosaic_0001>
module attributes {stable_mosaic.version = 11 : i64} {
  func.func @kernel(%arg0: i32, %arg1: i32, %arg2: i32, %arg3: memref<200x200xf32, #tpu.memory_space<vmem>>, %arg4: memref<200x256xbf16, #tpu.memory_space<vmem>>, %arg5: memref<1x256xf32, #tpu.memory_space<vmem>>, %arg6: memref<200x256xf32, #tpu.memory_space<vmem>>) attributes {dimension_semantics = [#tpu.dimension_semantics<parallel>, #tpu.dimension_semantics<parallel>, #tpu.dimension_semantics<arbitrary>], iteration_bounds = array<i64: 1, 1, 1>, scalar_prefetch = 0 : i64, scratch_operands = 0 : i64, tpu.core_type = #tpu.core_type<tc>, window_params = [{transform_indices = @transform_0, window_bounds = array<i64: 200, 200>}, {transform_indices = @transform_1, window_bounds = array<i64: 200, 256>}, {transform_indices = @transform_2, window_bounds = array<i64: 1, 256>}, {transform_indices = @transform_3, window_bounds = array<i64: 200, 256>}]} {
    %c0 = arith.constant 0 : index
    %c0_0 = arith.constant 0 : index
    %0 = vector.load %arg3[%c0, %c0_0] : memref<200x200xf32, #tpu.memory_space<vmem>>, vector<200x200xf32>
    %1 = arith.truncf %0 : vector<200x200xf32> to vector<200x200xbf16>
    %c0_1 = arith.constant 0 : index
    %c0_2 = arith.constant 0 : index
    %2 = vector.load %arg4[%c0_1, %c0_2] : memref<200x256xbf16, #tpu.memory_space<vmem>>, vector<200x256xbf16>
    %cst = arith.constant dense<0.000000e+00> : vector<200x256xf32>
    %3 = tpu.matmul %1, %2, %cst {dimension_numbers = #tpu.dot_dimension_numbers<[1], [0], [0], [1], [0, 0, 1, 1], [], []>} : vector<200x200xbf16>, vector<200x256xbf16>, vector<200x256xf32> -> vector<200x256xf32>
    %c0_3 = arith.constant 0 : index
    %c0_4 = arith.constant 0 : index
    %4 = vector.load %arg5[%c0_3, %c0_4] : memref<1x256xf32, #tpu.memory_space<vmem>>, vector<1x256xf32>
    %5 = vector.broadcast %4 : vector<1x256xf32> to vector<200x256xf32>
    %6 = arith.addf %3, %5 : vector<200x256xf32>
    %c0_5 = arith.constant 0 : index
    %c0_6 = arith.constant 0 : index
    %7 = vector.load %arg6[%c0_5, %c0_6] : memref<200x256xf32, #tpu.memory_space<vmem>>, vector<200x256xf32>
    tpu.vector_store %arg6[%c0_5, %c0_6], %6 {strides = array<i32>} : memref<200x256xf32, #tpu.memory_space<vmem>>, vector<200x256xf32>,
    return
  }
  func.func @transform_0(%arg0: i32, %arg1: i32, %arg2: i32) -> (i32, i32) {
    %c0_i32 = arith.constant 0 : i32
    return %arg0, %arg2 : i32, i32
  }
  func.func @transform_1(%arg0: i32, %arg1: i32, %arg2: i32) -> (i32, i32) {
    %c0_i32 = arith.constant 0 : i32
    %c0_i32_0 = arith.constant 0 : i32
    return %c0_i32, %arg1 : i32, i32
  }
  func.func @transform_2(%arg0: i32, %arg1: i32, %arg2: i32) -> (i32, i32) {
    %c0_i32 = arith.constant 0 : i32
    %c0_i32_0 = arith.constant 0 : i32
    return %c0_i32, %arg1 : i32, i32
  }
  func.func @transform_3(%arg0: i32, %arg1: i32, %arg2: i32) -> (i32, i32) {
    %c0_i32 = arith.constant 0 : i32
    return %arg0, %arg1 : i32, i32
  }
}

module attributes {stable_mosaic.version = 11 : i64} {
  func.func @_support_kernel(%arg0: i32, %arg1: memref<200x96xf32, #tpu.memory_space<vmem>>, %arg2: memref<96x256xf32, #tpu.memory_space<vmem>>, %arg3: memref<200x256xbf16, #tpu.memory_space<vmem>>) attributes {dimension_semantics = [#tpu.dimension_semantics<parallel>], iteration_bounds = array<i64: 1>, scalar_prefetch = 0 : i64, scratch_operands = 0 : i64, tpu.core_type = #tpu.core_type<tc>, window_params = [{transform_indices = @transform_0, window_bounds = array<i64: 200, 96>}, {pipeline_mode = #tpu.pipeline_mode<synchronous>, transform_indices = @transform_1, window_bounds = array<i64: 96, 256>}, {transform_indices = @transform_2, window_bounds = array<i64: 200, 256>}]} {
    %c0 = arith.constant 0 : index
    %c0_0 = arith.constant 0 : index
    %0 = vector.load %arg1[%c0, %c0_0] : memref<200x96xf32, #tpu.memory_space<vmem>>, vector<200x96xf32>
    %c0_1 = arith.constant 0 : index
    %c0_2 = arith.constant 0 : index
    %1 = vector.load %arg2[%c0_1, %c0_2] : memref<96x256xf32, #tpu.memory_space<vmem>>, vector<96x256xf32>
    %cst = arith.constant dense<0.000000e+00> : vector<200x256xf32>
    %2 = tpu.matmul %0, %1, %cst {dimension_numbers = #tpu.dot_dimension_numbers<[1], [0], [0], [1], [0, 0, 1, 1], [], []>} : vector<200x96xf32>, vector<96x256xf32>, vector<200x256xf32> -> vector<200x256xf32>
    %3 = arith.truncf %2 : vector<200x256xf32> to vector<200x256xbf16>
    %c0_3 = arith.constant 0 : index
    %c0_4 = arith.constant 0 : index
    %4 = vector.load %arg3[%c0_3, %c0_4] : memref<200x256xbf16, #tpu.memory_space<vmem>>, vector<200x256xbf16>
    tpu.vector_store %arg3[%c0_3, %c0_4], %3 {strides = array<i32>} : memref<200x256xbf16, #tpu.memory_space<vmem>>, vector<200x256xbf16>,
    return
  }
  func.func @transform_0(%arg0: i32) -> (i32, i32) {
    %c0_i32 = arith.constant 0 : i32
    %c0_i32_0 = arith.constant 0 : i32
    return %arg0, %c0_i32 : i32, i32
  }
  func.func @transform_1(%arg0: i32) -> (i32, i32) {
    %c0_i32 = arith.constant 0 : i32
    %c0_i32_0 = arith.constant 0 : i32
    %c0_i32_1 = arith.constant 0 : i32
    return %c0_i32, %c0_i32_0 : i32, i32
  }
  func.func @transform_2(%arg0: i32) -> (i32, i32) {
    %c0_i32 = arith.constant 0 : i32
    %c0_i32_0 = arith.constant 0 : i32
    return %arg0, %c0_i32 : i32, i32
  }
}

</mosaic_0001>

<llo_original>
// kernel: hgnn_conv_forward.3
$region0: #{hgnn_conv_forward.3}
  #allocation0 [shape = 'u32[]', space=smem, size = 0x4, offset = 0x4, fixed_abs, tag = 'smem constant byte address 0x4 - core index']
  #allocation1 [shape = 'u32[144,128]{1,0:T(1,128)}', space=vmem, size = 0x12000, scoped, tag = 'internal scratch']
  %s0 = inlined_call_operand.vmem [shape: f32[200,200], index: 0, kind: input, shape index: {}]
  %s1 = inlined_call_operand.vmem [shape: bf16[200,256], index: 1, kind: input, shape index: {}]
  %s2 = inlined_call_operand.vmem [shape: f32[1,256], index: 2, kind: input, shape index: {}]
  %s3 = inlined_call_operand.vmem [shape: f32[200,256], index: 3, kind: output, shape index: {}]
  %s4 = sld [smem:[#allocation0]]
  $region22: #{hgnn_conv_forward.3} parent=0
    _
  %s6 = ssub.s32 1, %s4
  %s7 = scalar_select 0, %s6, %s4
  // Predicated region
  $region2: #{hgnn_conv_forward.3} parent=0 // pred_check
    _
  $region3: #{hgnn_conv_forward.3} parent=0 // pred_check_branch
    %9 = sbr.rel (0) target = $region5
  $region4: #{hgnn_conv_forward.3} parent=0 // pred_region
    _
  $region5: #{hgnn_conv_forward.3} parent=0 // pred_fallthru
    _
  // Predicated region
  $region6: #{hgnn_conv_forward.3} parent=0 // pred_check
    _
  $region7: #{hgnn_conv_forward.3} parent=0 // pred_check_branch
    %11 = sbr.rel (0) target = $region9
  $region8: #{hgnn_conv_forward.3} parent=0 // pred_region
    _
  $region9: #{hgnn_conv_forward.3} parent=0 // pred_fallthru
    _
  // Predicated region
  $region10: #{hgnn_conv_forward.3} parent=0 // pred_check
    _
  $region11: #{hgnn_conv_forward.3} parent=0 // pred_check_branch
    %13 = sbr.rel (0) target = $region13
  $region12: #{hgnn_conv_forward.3} parent=0 // pred_region
    _
  $region13: #{hgnn_conv_forward.3} parent=0 // pred_fallthru
    _
  %v15 = vld [vmem:[%s0] sm:$0xff]
  %v16 = vld [vmem:[%s0 + $0x8] sm:$0xff]
  %v17 = vld [vmem:[%s0 + $0x10] sm:$0xff]
  %v18 = vld [vmem:[%s0 + $0x18] sm:$0xff]
  %v19 = vld [vmem:[%s0 + $0x20] sm:$0xff]
  %v20 = vld [vmem:[%s0 + $0x28] sm:$0xff]
  %v21 = vld [vmem:[%s0 + $0x30] sm:$0xff]
  %v22 = vld [vmem:[%s0 + $0x38] sm:$0xff]
  %v23 = vld [vmem:[%s0 + $0x40] sm:$0xff]
  %v24 = vld [vmem:[%s0 + $0x48] sm:$0xff]
  %v25 = vld [vmem:[%s0 + $0x50] sm:$0xff]
  %v26 = vld [vmem:[%s0 + $0x58] sm:$0xff]
  %v27 = vld [vmem:[%s0 + $0x60] sm:$0xff]
  %v28 = vld [vmem:[%s0 + $0x68] sm:$0xff]
  %v29 = vld [vmem:[%s0 + $0x70] sm:$0xff]
  %v30 = vld [vmem:[%s0 + $0x78] sm:$0xff]
  %v31 = vld [vmem:[%s0 + $0x80] sm:$0xff]
  %v32 = vld [vmem:[%s0 + $0x88] sm:$0xff]
  %v33 = vld [vmem:[%s0 + $0x90] sm:$0xff]
  %v34 = vld [vmem:[%s0 + $0x98] sm:$0xff]
  %v35 = vld [vmem:[%s0 + $0xa0] sm:$0xff]
  %v36 = vld [vmem:[%s0 + $0xa8] sm:$0xff]
  %v37 = vld [vmem:[%s0 + $0xb0] sm:$0xff]
  %v38 = vld [vmem:[%s0 + $0xb8] sm:$0xff]
  %v39 = vld [vmem:[%s0 + $0xc0] sm:$0xff]
  %v40 = vld [vmem:[%s0 + $0xc8] sm:$0xff]
  %v41 = vld [vmem:[%s0 + $0xd0] sm:$0xff]
  %v42 = vld [vmem:[%s0 + $0xd8] sm:$0xff]
  %v43 = vld [vmem:[%s0 + $0xe0] sm:$0xff]
  %v44 = vld [vmem:[%s0 + $0xe8] sm:$0xff]
  %v45 = vld [vmem:[%s0 + $0xf0] sm:$0xff]
  %v46 = vld [vmem:[%s0 + $0xf8] sm:$0xff]
  %v47 = vld [vmem:[%s0 + $0x100] sm:$0xff]
  %v48 = vld [vmem:[%s0 + $0x108] sm:$0xff]
  %v49 = vld [vmem:[%s0 + $0x110] sm:$0xff]
  %v50 = vld [vmem:[%s0 + $0x118] sm:$0xff]
  %v51 = vld [vmem:[%s0 + $0x120] sm:$0xff]
  %v52 = vld [vmem:[%s0 + $0x128] sm:$0xff]
  %v53 = vld [vmem:[%s0 + $0x130] sm:$0xff]
  %v54 = vld [vmem:[%s0 + $0x138] sm:$0xff]
  %v55 = vld [vmem:[%s0 + $0x140] sm:$0xff]
  %v56 = vld [vmem:[%s0 + $0x148] sm:$0xff]
  %v57 = vld [vmem:[%s0 + $0x150] sm:$0xff]
  %v58 = vld [vmem:[%s0 + $0x158] sm:$0xff]
  %v59 = vld [vmem:[%s0 + $0x160] sm:$0xff]
  %v60 = vld [vmem:[%s0 + $0x168] sm:$0xff]
  %v61 = vld [vmem:[%s0 + $0x170] sm:$0xff]
  %v62 = vld [vmem:[%s0 + $0x178] sm:$0xff]
  %v63 = vld [vmem:[%s0 + $0x180] sm:$0xff]
  %v64 = vld [vmem:[%s0 + $0x188] sm:$0xff]
  %v65 = vpack.c.bf16 %v17, %v15
  %v66 = vpack.c.bf16 %v18, %v16
  %v67 = vpack.c.bf16 %v21, %v19
  %v68 = vpack.c.bf16 %v22, %v20
  %v69 = vpack.c.bf16 %v25, %v23
  %v70 = vpack.c.bf16 %v26, %v24
  %v71 = vpack.c.bf16 %v29, %v27
  %v72 = vpack.c.bf16 %v30, %v28
  %v73 = vpack.c.bf16 %v33, %v31
  %v74 = vpack.c.bf16 %v34, %v32
  %v75 = vpack.c.bf16 %v37, %v35
  %v76 = vpack.c.bf16 %v38, %v36
  %v77 = vpack.c.bf16 %v41, %v39
  %v78 = vpack.c.bf16 %v42, %v40
  %v79 = vpack.c.bf16 %v45, %v43
  %v80 = vpack.c.bf16 %v46, %v44
  %v81 = vpack.c.bf16 %v49, %v47
  %v82 = vpack.c.bf16 %v50, %v48
  %v83 = vpack.c.bf16 %v53, %v51
  %v84 = vpack.c.bf16 %v54, %v52
  %v85 = vpack.c.bf16 %v57, %v55
  %v86 = vpack.c.bf16 %v58, %v56
  %v87 = vpack.c.bf16 %v61, %v59
  %v88 = vpack.c.bf16 %v62, %v60
  %v89 = vpack.c.bf16 %v63, %v63
  %v90 = vpack.c.bf16 %v64, %v64
  %v91 = vld [vmem:[%s1] sm:$0xff]
  %v92 = vld [vmem:[%s1 + $0x8] sm:$0xff]
  %v93 = vld [vmem:[%s1 + $0x10] sm:$0xff]
  %v94 = vld [vmem:[%s1 + $0x18] sm:$0xff]
  %v95 = vld [vmem:[%s1 + $0x20] sm:$0xff]
  %v96 = vld [vmem:[%s1 + $0x28] sm:$0xff]
  %v97 = vld [vmem:[%s1 + $0x30] sm:$0xff]
  %v98 = vld [vmem:[%s1 + $0x38] sm:$0xff]
  %v99 = vld [vmem:[%s1 + $0x40] sm:$0xff]
  %v100 = vld [vmem:[%s1 + $0x48] sm:$0xff]
  %v101 = vld [vmem:[%s1 + $0x50] sm:$0xff]
  %v102 = vld [vmem:[%s1 + $0x58] sm:$0xff]
  %v103 = vld [vmem:[%s1 + $0x60] sm:$0xff]
  %v104 = vld [vmem:[%s1 + $0x68] sm:$0xff]
  %v105 = vld [vmem:[%s1 + $0x70] sm:$0xff]
  %v106 = vld [vmem:[%s1 + $0x78] sm:$0xff]
  %v107 = vld [vmem:[%s1 + $0x80] sm:$0xff]
  %v108 = vld [vmem:[%s1 + $0x88] sm:$0xff]
  %v109 = vld [vmem:[%s1 + $0x90] sm:$0xff]
  %v110 = vld [vmem:[%s1 + $0x98] sm:$0xff]
  %v111 = vld [vmem:[%s1 + $0xa0] sm:$0xff]
  %v112 = vld [vmem:[%s1 + $0xa8] sm:$0xff]
  %v113 = vld [vmem:[%s1 + $0xb0] sm:$0xff]
  %v114 = vld [vmem:[%s1 + $0xb8] sm:$0xff]
  %v115 = vld [vmem:[%s1 + $0xc0] sm:$0xff]
  %v116 = vld [vmem:[%s2] sm:$0x3]
  %v118 = vlaneseq
  %v119 = vshrl.u32 %v118, 7
  %v120 = vsub.s32 0, %v119
  %v121 = vrot.slane %v116, %v120
  %v122 = vlaneseq
  %v123 = vshrl.u32 %v122, 7
  %v124 = vsub.s32 1, %v123
  %v125 = vrot.slane %v116, %v124
  %v153 = vunpack.c.l.b16 %v91
  %v154 = vunpack.c.h.b16 %v91
  %v155 = vunpack.c.l.b16 %v92
  %v156 = vunpack.c.h.b16 %v92
  %v157 = vunpack.c.l.b16 %v93
  %v158 = vunpack.c.h.b16 %v93
  %v159 = vunpack.c.l.b16 %v94
  %v160 = vunpack.c.h.b16 %v94
  %v161 = vunpack.c.l.b16 %v95
  %v162 = vunpack.c.h.b16 %v95
  %v163 = vunpack.c.l.b16 %v96
  %v164 = vunpack.c.h.b16 %v96
  %v165 = vunpack.c.l.b16 %v97
  %v166 = vunpack.c.h.b16 %v97
  %v167 = vunpack.c.l.b16 %v98
  %v168 = vunpack.c.h.b16 %v98
  %v169 = vunpack.c.l.b16 %v99
  %v170 = vunpack.c.h.b16 %v99
  %v171 = vunpack.c.l.b16 %v100
  %v172 = vunpack.c.h.b16 %v100
  %v173 = vunpack.c.l.b16 %v101
  %v174 = vunpack.c.h.b16 %v101
  %v175 = vunpack.c.l.b16 %v102
  %v176 = vunpack.c.h.b16 %v102
  %v177 = vunpack.c.l.b16 %v103
  %v178 = vunpack.c.h.b16 %v103
  %v179 = vunpack.c.l.b16 %v104
  %v180 = vunpack.c.h.b16 %v104
  %v181 = vunpack.c.l.b16 %v105
  %v182 = vunpack.c.h.b16 %v105
  %v183 = vunpack.c.l.b16 %v106
  %v184 = vunpack.c.h.b16 %v106
  %v185 = vunpack.c.l.b16 %v107
  %v186 = vunpack.c.h.b16 %v107
  %v187 = vunpack.c.l.b16 %v108
  %v188 = vunpack.c.h.b16 %v108
  %v189 = vunpack.c.l.b16 %v109
  %v190 = vunpack.c.h.b16 %v109
  %v191 = vunpack.c.l.b16 %v110
  %v192 = vunpack.c.h.b16 %v110
  %v193 = vunpack.c.l.b16 %v111
  %v194 = vunpack.c.h.b16 %v111
  %v195 = vunpack.c.l.b16 %v112
  %v196 = vunpack.c.h.b16 %v112
  %v197 = vunpack.c.l.b16 %v113
  %v198 = vunpack.c.h.b16 %v113
  %v199 = vunpack.c.l.b16 %v114
  %v200 = vunpack.c.h.b16 %v114
  %v201 = vunpack.c.l.b16 %v115
  %v202 = vunpack.c.h.b16 %v115
  %v203 = vpack.c.b16 %v155, %v153
  %v204 = vpack.c.b16 %v156, %v154
  %v205 = vpack.c.b16 %v159, %v157
  %v206 = vpack.c.b16 %v160, %v158
  %v207 = vpack.c.b16 %v163, %v161
  %v208 = vpack.c.b16 %v164, %v162
  %v209 = vpack.c.b16 %v167, %v165
  %v210 = vpack.c.b16 %v168, %v166
  %v211 = vpack.c.b16 %v171, %v169
  %v212 = vpack.c.b16 %v172, %v170
  %v213 = vpack.c.b16 %v175, %v173
  %v214 = vpack.c.b16 %v176, %v174
  %v215 = vpack.c.b16 %v179, %v177
  %v216 = vpack.c.b16 %v180, %v178
  %v217 = vpack.c.b16 %v183, %v181
  %v218 = vpack.c.b16 %v184, %v182
  %v219 = vpack.c.b16 %v187, %v185
  %v220 = vpack.c.b16 %v188, %v186
  %v221 = vpack.c.b16 %v191, %v189
  %v222 = vpack.c.b16 %v192, %v190
  %v223 = vpack.c.b16 %v195, %v193
  %v224 = vpack.c.b16 %v196, %v194
  %v225 = vpack.c.b16 %v199, %v197
  %v226 = vpack.c.b16 %v200, %v198
  %v227 = vpack.c.b16 %v201, %v201
  %v228 = vpack.c.b16 %v202, %v202
  %vm253 = vcmask 588800
  %v255 = vsel %vm253, %v66, 0
  %v258 = vsel %vm253, %v68, 0
  %v261 = vsel %vm253, %v70, 0
  %v264 = vsel %vm253, %v72, 0
  %v267 = vsel %vm253, %v74, 0
  %v270 = vsel %vm253, %v76, 0
  %v273 = vsel %vm253, %v78, 0
  %v276 = vsel %vm253, %v80, 0
  %v279 = vsel %vm253, %v82, 0
  %v282 = vsel %vm253, %v84, 0
  %v285 = vsel %vm253, %v86, 0
  %v288 = vsel %vm253, %v88, 0
  %v291 = vsel %vm253, %v90, 0
  %vm293 = vcmask 1043456
  %v295 = vsel %vm293, %v227, 0
  %v298 = vsel %vm293, %v228, 0
  %300 = vmatprep.subr.bf16.mxu0 %v204
  %301 = vmatpush1.bf16.msra.mxu0 %v203
  %302 = vmatprep.subr.bf16.mxu0 %v206
  %303 = vmatpush1.bf16.msra.mxu0 %v205
  %304 = vmatprep.subr.bf16.mxu0 %v208
  %305 = vmatpush1.bf16.msra.mxu0 %v207
  %306 = vmatprep.subr.bf16.mxu0 %v210
  %307 = vmatpush1.bf16.msra.mxu0 %v209
  %308 = vmatprep.subr.bf16.mxu0 %v212
  %309 = vmatpush1.bf16.msra.mxu0 %v211
  %310 = vmatprep.subr.bf16.mxu0 %v214
  %311 = vmatpush1.bf16.msra.mxu0 %v213
  %312 = vmatprep.subr.bf16.mxu0 %v216
  %313 = vmatpush1.bf16.msra.mxu0 %v215
  %314 = vmatprep.subr.bf16.mxu0 %v218
  %315 = vmatpush1.bf16.msra.mxu0 %v217
  %316 = vmatprep.subr.bf16.mxu0 %v220
  %317 = vmatpush1.bf16.msra.mxu0 %v219
  %318 = vmatprep.subr.bf16.mxu0 %v222
  %319 = vmatpush1.bf16.msra.mxu0 %v221
  %320 = vmatprep.subr.bf16.mxu0 %v224
  %321 = vmatpush1.bf16.msra.mxu0 %v223
  %322 = vmatprep.subr.bf16.mxu0 %v226
  %323 = vmatpush1.bf16.msra.mxu0 %v225
  %324 = vmatprep.subr.bf16.mxu0 %v298
  %325 = vmatpush1.bf16.msra.mxu0 %v295
  %326 = vmatprep.subr.bf16.mxu0 0
  %327 = vmatpush1.bf16.msra.mxu0 0
  %328 = vmatprep.subr.bf16.mxu0 0
  %329 = vmatpush1.bf16.msra.mxu0 0
  %330 = vmatprep.subr.bf16.mxu0 0
  %331 = vmatpush1.bf16.msra.mxu0 0
  %332 = vmatprep.mubr.bf16.mxu0 %v255
  %333 = vmatmul.mubr.bf16.gmra.mrb[0].mxu0 %v65
  %v334 = vpop.f32.mrb[0].mxu0
  %v335 = vadd.f32 %v121, %v334
  %v336 = vpop.f32.mrb[0].mxu0
  %v337 = vadd.f32 %v125, %v336
  %v338 = vpop.f32.mrb[0].mxu0
  %v339 = vadd.f32 %v121, %v338
  %v340 = vpop.f32.mrb[0].mxu0
  %v341 = vadd.f32 %v125, %v340
  %342 = vmatprep.mubr.bf16.mxu0 %v258
  %343 = vmatmul.mubr.bf16.gmra.mrb[0].mxu0 %v67
  %v344 = vpop.f32.mrb[0].mxu0
  %v345 = vadd.f32 %v121, %v344
  %v346 = vpop.f32.mrb[0].mxu0
  %v347 = vadd.f32 %v125, %v346
  %v348 = vpop.f32.mrb[0].mxu0
  %v349 = vadd.f32 %v121, %v348
  %v350 = vpop.f32.mrb[0].mxu0
  %v351 = vadd.f32 %v125, %v350
  %352 = vmatprep.mubr.bf16.mxu0 %v261
  %353 = vmatmul.mubr.bf16.gmra.mrb[0].mxu0 %v69
  %v354 = vpop.f32.mrb[0].mxu0
  %v355 = vadd.f32 %v121, %v354
  %v356 = vpop.f32.mrb[0].mxu0
  %v357 = vadd.f32 %v125, %v356
  %v358 = vpop.f32.mrb[0].mxu0
  %v359 = vadd.f32 %v121, %v358
  %v360 = vpop.f32.mrb[0].mxu0
  %v361 = vadd.f32 %v125, %v360
  %362 = vmatprep.mubr.bf16.mxu0 %v264
  %363 = vmatmul.mubr.bf16.gmra.mrb[0].mxu0 %v71
  %v364 = vpop.f32.mrb[0].mxu0
  %v365 = vadd.f32 %v121, %v364
  %v366 = vpop.f32.mrb[0].mxu0
  %v367 = vadd.f32 %v125, %v366
  %v368 = vpop.f32.mrb[0].mxu0
  %v369 = vadd.f32 %v121, %v368
  %v370 = vpop.f32.mrb[0].mxu0
  %v371 = vadd.f32 %v125, %v370
  %372 = vmatprep.mubr.bf16.mxu0 %v267
  %373 = vmatmul.mubr.bf16.gmra.mrb[0].mxu0 %v73
  %v374 = vpop.f32.mrb[0].mxu0
  %v375 = vadd.f32 %v121, %v374
  %v376 = vpop.f32.mrb[0].mxu0
  %v377 = vadd.f32 %v125, %v376
  %v378 = vpop.f32.mrb[0].mxu0
  %v379 = vadd.f32 %v121, %v378
  %v380 = vpop.f32.mrb[0].mxu0
  %v381 = vadd.f32 %v125, %v380
  %382 = vmatprep.mubr.bf16.mxu0 %v270
  %383 = vmatmul.mubr.bf16.gmra.mrb[0].mxu0 %v75
  %v384 = vpop.f32.mrb[0].mxu0
  %v385 = vadd.f32 %v121, %v384
  %v386 = vpop.f32.mrb[0].mxu0
  %v387 = vadd.f32 %v125, %v386
  %v388 = vpop.f32.mrb[0].mxu0
  %v389 = vadd.f32 %v121, %v388
  %v390 = vpop.f32.mrb[0].mxu0
  %v391 = vadd.f32 %v125, %v390
  %392 = vmatprep.mubr.bf16.mxu0 %v273
  %393 = vmatmul.mubr.bf16.gmra.mrb[0].mxu0 %v77
  %v394 = vpop.f32.mrb[0].mxu0
  %v395 = vadd.f32 %v121, %v394
  %v396 = vpop.f32.mrb[0].mxu0
  %v397 = vadd.f32 %v125, %v396
  %v398 = vpop.f32.mrb[0].mxu0
  %v399 = vadd.f32 %v121, %v398
  %v400 = vpop.f32.mrb[0].mxu0
  %v401 = vadd.f32 %v125, %v400
  %402 = vmatprep.mubr.bf16.mxu0 %v276
  %403 = vmatmul.mubr.bf16.gmra.mrb[0].mxu0 %v79
  %v404 = vpop.f32.mrb[0].mxu0
  %v405 = vadd.f32 %v121, %v404
  %v406 = vpop.f32.mrb[0].mxu0
  %v407 = vadd.f32 %v125, %v406
  %v408 = vpop.f32.mrb[0].mxu0
  %v409 = vadd.f32 %v121, %v408
  %v410 = vpop.f32.mrb[0].mxu0
  %v411 = vadd.f32 %v125, %v410
  %412 = vmatprep.mubr.bf16.mxu0 %v279
  %413 = vmatmul.mubr.bf16.gmra.mrb[0].mxu0 %v81
  %v414 = vpop.f32.mrb[0].mxu0
  %v415 = vadd.f32 %v121, %v414
  %v416 = vpop.f32.mrb[0].mxu0
  %v417 = vadd.f32 %v125, %v416
  %v418 = vpop.f32.mrb[0].mxu0
  %v419 = vadd.f32 %v121, %v418
  %v420 = vpop.f32.mrb[0].mxu0
  %v421 = vadd.f32 %v125, %v420
  %422 = vmatprep.mubr.bf16.mxu0 %v282
  %423 = vmatmul.mubr.bf16.gmra.mrb[0].mxu0 %v83
  %v424 = vpop.f32.mrb[0].mxu0
  %v425 = vadd.f32 %v121, %v424
  %v426 = vpop.f32.mrb[0].mxu0
  %v427 = vadd.f32 %v125, %v426
  %v428 = vpop.f32.mrb[0].mxu0
  %v429 = vadd.f32 %v121, %v428
  %v430 = vpop.f32.mrb[0].mxu0
  %v431 = vadd.f32 %v125, %v430
  %432 = vmatprep.mubr.bf16.mxu0 %v285
  %433 = vmatmul.mubr.bf16.gmra.mrb[0].mxu0 %v85
  %v434 = vpop.f32.mrb[0].mxu0
  %v435 = vadd.f32 %v121, %v434
  %v436 = vpop.f32.mrb[0].mxu0
  %v437 = vadd.f32 %v125, %v436
  %v438 = vpop.f32.mrb[0].mxu0
  %v439 = vadd.f32 %v121, %v438
  %v440 = vpop.f32.mrb[0].mxu0
  %v441 = vadd.f32 %v125, %v440
  %442 = vmatprep.mubr.bf16.mxu0 %v288
  %443 = vmatmul.mubr.bf16.gmra.mrb[0].mxu0 %v87
  %v444 = vpop.f32.mrb[0].mxu0
  %v445 = vadd.f32 %v121, %v444
  %v446 = vpop.f32.mrb[0].mxu0
  %v447 = vadd.f32 %v125, %v446
  %v448 = vpop.f32.mrb[0].mxu0
  %v449 = vadd.f32 %v121, %v448
  %v450 = vpop.f32.mrb[0].mxu0
  %v451 = vadd.f32 %v125, %v450
  %452 = vmatprep.mubr.bf16.mxu0 %v291
  %453 = vmatmul.mubr.bf16.gmra.mrb[0].mxu0 %v89
  %v454 = vpop.f32.mrb[0].mxu0
  %v455 = vadd.f32 %v121, %v454
  %v456 = vpop.f32.mrb[0].mxu0
  %v457 = vadd.f32 %v125, %v456
  %v458 = vpop.f32.mrb[0].mxu0
  %v459 = vpop.f32.mrb[0].mxu0
  %460 = vdwg.mxu0
  %461 = vst [vmem:[%s3] sm:$0xff] %v335
  %462 = vst [vmem:[%s3 + $0x8] sm:$0xff] %v337
  %463 = vst [vmem:[%s3 + $0x10] sm:$0xff] %v339
  %464 = vst [vmem:[%s3 + $0x18] sm:$0xff] %v341
  %465 = vst [vmem:[%s3 + $0x20] sm:$0xff] %v345
  %466 = vst [vmem:[%s3 + $0x28] sm:$0xff] %v347
  %467 = vst [vmem:[%s3 + $0x30] sm:$0xff] %v349
  %468 = vst [vmem:[%s3 + $0x38] sm:$0xff] %v351
  %469 = vst [vmem:[%s3 + $0x40] sm:$0xff] %v355
  %470 = vst [vmem:[%s3 + $0x48] sm:$0xff] %v357
  %471 = vst [vmem:[%s3 + $0x50] sm:$0xff] %v359
  %472 = vst [vmem:[%s3 + $0x58] sm:$0xff] %v361
  %473 = vst [vmem:[%s3 + $0x60] sm:$0xff] %v365
  %474 = vst [vmem:[%s3 + $0x68] sm:$0xff] %v367
  %475 = vst [vmem:[%s3 + $0x70] sm:$0xff] %v369
  %476 = vst [vmem:[%s3 + $0x78] sm:$0xff] %v371
  %477 = vst [vmem:[%s3 + $0x80] sm:$0xff] %v375
  %478 = vst [vmem:[%s3 + $0x88] sm:$0xff] %v377
  %479 = vst [vmem:[%s3 + $0x90] sm:$0xff] %v379
  %480 = vst [vmem:[%s3 + $0x98] sm:$0xff] %v381
  %481 = vst [vmem:[%s3 + $0xa0] sm:$0xff] %v385
  %482 = vst [vmem:[%s3 + $0xa8] sm:$0xff] %v387
  %483 = vst [vmem:[%s3 + $0xb0] sm:$0xff] %v389
  %484 = vst [vmem:[%s3 + $0xb8] sm:$0xff] %v391
  %485 = vst [vmem:[%s3 + $0xc0] sm:$0xff] %v395
  %486 = vst [vmem:[%s3 + $0xc8] sm:$0xff] %v397
  %487 = vst [vmem:[%s3 + $0xd0] sm:$0xff] %v399
  %488 = vst [vmem:[%s3 + $0xd8] sm:$0xff] %v401
  %489 = vst [vmem:[%s3 + $0xe0] sm:$0xff] %v405
  %490 = vst [vmem:[%s3 + $0xe8] sm:$0xff] %v407
  %491 = vst [vmem:[%s3 + $0xf0] sm:$0xff] %v409
  %492 = vst [vmem:[%s3 + $0xf8] sm:$0xff] %v411
  %493 = vst [vmem:[%s3 + $0x100] sm:$0xff] %v415
  %494 = vst [vmem:[%s3 + $0x108] sm:$0xff] %v417
  %495 = vst [vmem:[%s3 + $0x110] sm:$0xff] %v419
  %496 = vst [vmem:[%s3 + $0x118] sm:$0xff] %v421
  %497 = vst [vmem:[%s3 + $0x120] sm:$0xff] %v425
  %498 = vst [vmem:[%s3 + $0x128] sm:$0xff] %v427
  %499 = vst [vmem:[%s3 + $0x130] sm:$0xff] %v429
  %500 = vst [vmem:[%s3 + $0x138] sm:$0xff] %v431
  %501 = vst [vmem:[%s3 + $0x140] sm:$0xff] %v435
  %502 = vst [vmem:[%s3 + $0x148] sm:$0xff] %v437
  %503 = vst [vmem:[%s3 + $0x150] sm:$0xff] %v439
  %504 = vst [vmem:[%s3 + $0x158] sm:$0xff] %v441
  %505 = vst [vmem:[%s3 + $0x160] sm:$0xff] %v445
  %506 = vst [vmem:[%s3 + $0x168] sm:$0xff] %v447
  %507 = vst [vmem:[%s3 + $0x170] sm:$0xff] %v449
  %508 = vst [vmem:[%s3 + $0x178] sm:$0xff] %v451
  %509 = vst [vmem:[%s3 + $0x180] sm:$0xff] %v455
  %510 = vst [vmem:[%s3 + $0x188] sm:$0xff] %v457
  // Predicated region
  $region14: #{hgnn_conv_forward.3} parent=0 // pred_check
    _
  $region15: #{hgnn_conv_forward.3} parent=0 // pred_check_branch
    %512 = sbr.rel (0) target = $region17
  $region16: #{hgnn_conv_forward.3} parent=0 // pred_region
    _
  $region17: #{hgnn_conv_forward.3} parent=0 // pred_fallthru
    _
  // Predicated region
  $region18: #{hgnn_conv_forward.3} parent=0 // pred_check
    _
  $region19: #{hgnn_conv_forward.3} parent=0 // pred_check_branch
    %514 = sbr.rel (0) target = $region21
  $region20: #{hgnn_conv_forward.3} parent=0 // pred_region
    _
  $region21: #{hgnn_conv_forward.3} parent=0 // pred_fallthru
    _

// kernel: hgnn_conv_forward.2
$region0: #{hgnn_conv_forward.2}
  #allocation0 [shape = 'u32[]', space=smem, size = 0x4, offset = 0x4, fixed_abs, tag = 'smem constant byte address 0x4 - core index']
  #allocation1 [shape = 'u32[144,128]{1,0:T(1,128)}', space=vmem, size = 0x12000, scoped, tag = 'internal scratch']
  %s0 = inlined_call_operand.vmem [shape: f32[200,96], index: 0, kind: input, shape index: {}]
  %s1 = inlined_call_operand.vmem [shape: f32[96,256], index: 1, kind: input, shape index: {}]
  %s2 = inlined_call_operand.vmem [shape: bf16[200,256], index: 2, kind: output, shape index: {}]
  %s3 = sld [smem:[#allocation0]]
  $region18: #{hgnn_conv_forward.2} parent=0
    _
  %s5 = ssub.s32 1, %s3
  %s6 = scalar_select 0, %s5, %s3
  // Predicated region
  $region2: #{hgnn_conv_forward.2} parent=0 // pred_check
    _
  $region3: #{hgnn_conv_forward.2} parent=0 // pred_check_branch
    %8 = sbr.rel (0) target = $region5
  $region4: #{hgnn_conv_forward.2} parent=0 // pred_region
    _
  $region5: #{hgnn_conv_forward.2} parent=0 // pred_fallthru
    _
  // Predicated region
  $region6: #{hgnn_conv_forward.2} parent=0 // pred_check
    _
  $region7: #{hgnn_conv_forward.2} parent=0 // pred_check_branch
    %10 = sbr.rel (0) target = $region9
  $region8: #{hgnn_conv_forward.2} parent=0 // pred_region
    _
  $region9: #{hgnn_conv_forward.2} parent=0 // pred_fallthru
    _
  %v11 = vld [vmem:[%s0] sm:$0xff]
  %v12 = vld [vmem:[%s0 + $0x8] sm:$0xff]
  %v13 = vld [vmem:[%s0 + $0x10] sm:$0xff]
  %v14 = vld [vmem:[%s0 + $0x18] sm:$0xff]
  %v15 = vld [vmem:[%s0 + $0x20] sm:$0xff]
  %v16 = vld [vmem:[%s0 + $0x28] sm:$0xff]
  %v17 = vld [vmem:[%s0 + $0x30] sm:$0xff]
  %v18 = vld [vmem:[%s0 + $0x38] sm:$0xff]
  %v19 = vld [vmem:[%s0 + $0x40] sm:$0xff]
  %v20 = vld [vmem:[%s0 + $0x48] sm:$0xff]
  %v21 = vld [vmem:[%s0 + $0x50] sm:$0xff]
  %v22 = vld [vmem:[%s0 + $0x58] sm:$0xff]
  %v23 = vld [vmem:[%s0 + $0x60] sm:$0xff]
  %v24 = vld [vmem:[%s0 + $0x68] sm:$0xff]
  %v25 = vld [vmem:[%s0 + $0x70] sm:$0xff]
  %v26 = vld [vmem:[%s0 + $0x78] sm:$0xff]
  %v27 = vld [vmem:[%s0 + $0x80] sm:$0xff]
  %v28 = vld [vmem:[%s0 + $0x88] sm:$0xff]
  %v29 = vld [vmem:[%s0 + $0x90] sm:$0xff]
  %v30 = vld [vmem:[%s0 + $0x98] sm:$0xff]
  %v31 = vld [vmem:[%s0 + $0xa0] sm:$0xff]
  %v32 = vld [vmem:[%s0 + $0xa8] sm:$0xff]
  %v33 = vld [vmem:[%s0 + $0xb0] sm:$0xff]
  %v34 = vld [vmem:[%s0 + $0xb8] sm:$0xff]
  %v35 = vld [vmem:[%s0 + $0xc0] sm:$0xff]
  %v36 = vld [vmem:[%s1] sm:$0xff]
  %v37 = vld [vmem:[%s1 + $0x8] sm:$0xff]
  %v38 = vld [vmem:[%s1 + $0x10] sm:$0xff]
  %v39 = vld [vmem:[%s1 + $0x18] sm:$0xff]
  %v40 = vld [vmem:[%s1 + $0x20] sm:$0xff]
  %v41 = vld [vmem:[%s1 + $0x28] sm:$0xff]
  %v42 = vld [vmem:[%s1 + $0x30] sm:$0xff]
  %v43 = vld [vmem:[%s1 + $0x38] sm:$0xff]
  %v44 = vld [vmem:[%s1 + $0x40] sm:$0xff]
  %v45 = vld [vmem:[%s1 + $0x48] sm:$0xff]
  %v46 = vld [vmem:[%s1 + $0x50] sm:$0xff]
  %v47 = vld [vmem:[%s1 + $0x58] sm:$0xff]
  %v48 = vld [vmem:[%s1 + $0x60] sm:$0xff]
  %v49 = vld [vmem:[%s1 + $0x68] sm:$0xff]
  %v50 = vld [vmem:[%s1 + $0x70] sm:$0xff]
  %v51 = vld [vmem:[%s1 + $0x78] sm:$0xff]
  %v52 = vld [vmem:[%s1 + $0x80] sm:$0xff]
  %v53 = vld [vmem:[%s1 + $0x88] sm:$0xff]
  %v54 = vld [vmem:[%s1 + $0x90] sm:$0xff]
  %v55 = vld [vmem:[%s1 + $0x98] sm:$0xff]
  %v56 = vld [vmem:[%s1 + $0xa0] sm:$0xff]
  %v57 = vld [vmem:[%s1 + $0xa8] sm:$0xff]
  %v58 = vld [vmem:[%s1 + $0xb0] sm:$0xff]
  %v59 = vld [vmem:[%s1 + $0xb8] sm:$0xff]
  %vm60 = vcmask 785408
  %v62 = vsel %vm60, %v11, 0
  %v65 = vsel %vm60, %v12, 0
  %v68 = vsel %vm60, %v13, 0
  %v71 = vsel %vm60, %v14, 0
  %v74 = vsel %vm60, %v15, 0
  %v77 = vsel %vm60, %v16, 0
  %v80 = vsel %vm60, %v17, 0
  %v83 = vsel %vm60, %v18, 0
  %v86 = vsel %vm60, %v19, 0
  %v89 = vsel %vm60, %v20, 0
  %v92 = vsel %vm60, %v21, 0
  %v95 = vsel %vm60, %v22, 0
  %v98 = vsel %vm60, %v23, 0
  %v101 = vsel %vm60, %v24, 0
  %v104 = vsel %vm60, %v25, 0
  %v107 = vsel %vm60, %v26, 0
  %v110 = vsel %vm60, %v27, 0
  %v113 = vsel %vm60, %v28, 0
  %v116 = vsel %vm60, %v29, 0
  %v119 = vsel %vm60, %v30, 0
  %v122 = vsel %vm60, %v31, 0
  %v125 = vsel %vm60, %v32, 0
  %v128 = vsel %vm60, %v33, 0
  %v131 = vsel %vm60, %v34, 0
  %v134 = vsel %vm60, %v35, 0
  %136 = vmatprep.subr.mxu0 %v37
  %137 = vmatpush1.msra.mxu0 %v36
  %138 = vmatprep.subr.mxu0 %v39
  %139 = vmatpush1.msra.mxu0 %v38
  %140 = vmatprep.subr.mxu0 %v41
  %141 = vmatpush1.msra.mxu0 %v40
  %142 = vmatprep.subr.mxu0 %v43
  %143 = vmatpush1.msra.mxu0 %v42
  %144 = vmatprep.subr.mxu0 %v45
  %145 = vmatpush1.msra.mxu0 %v44
  %146 = vmatprep.subr.mxu0 %v47
  %147 = vmatpush1.msra.mxu0 %v46
  %148 = vmatprep.subr.mxu0 %v49
  %149 = vmatpush1.msra.mxu0 %v48
  %150 = vmatprep.subr.mxu0 %v51
  %151 = vmatpush1.msra.mxu0 %v50
  %152 = vmatprep.subr.mxu0 %v53
  %153 = vmatpush1.msra.mxu0 %v52
  %154 = vmatprep.subr.mxu0 %v55
  %155 = vmatpush1.msra.mxu0 %v54
  %156 = vmatprep.subr.mxu0 %v57
  %157 = vmatpush1.msra.mxu0 %v56
  %158 = vmatprep.subr.mxu0 %v59
  %159 = vmatpush1.msra.mxu0 %v58
  %160 = vmatprep.subr.mxu0 0.0
  %161 = vmatpush1.msra.mxu0 0.0
  %162 = vmatprep.subr.mxu0 0.0
  %163 = vmatpush1.msra.mxu0 0.0
  %164 = vmatprep.subr.mxu0 0.0
  %165 = vmatpush1.msra.mxu0 0.0
  %166 = vmatprep.subr.mxu0 0.0
  %167 = vmatpush1.msra.mxu0 0.0
  %168 = vmatprep.subr.mxu0 0.0
  %169 = vmatpush1.msra.mxu0 0.0
  %170 = vmatprep.subr.mxu0 0.0
  %171 = vmatpush1.msra.mxu0 0.0
  %172 = vmatprep.subr.mxu0 0.0
  %173 = vmatpush1.msra.mxu0 0.0
  %174 = vmatprep.subr.mxu0 0.0
  %175 = vmatpush1.msra.mxu0 0.0
  %176 = vmatprep.subr.mxu0 0.0
  %177 = vmatpush1.msra.mxu0 0.0
  %178 = vmatprep.subr.mxu0 0.0
  %179 = vmatpush1.msra.mxu0 0.0
  %180 = vmatprep.subr.mxu0 0.0
  %181 = vmatpush1.msra.mxu0 0.0
  %182 = vmatprep.subr.mxu0 0.0
  %183 = vmatpush1.msra.mxu0 0.0
  %184 = vmatprep.subr.mxu0 0.0
  %185 = vmatpush1.msra.mxu0 0.0
  %186 = vmatprep.subr.mxu0 0.0
  %187 = vmatpush1.msra.mxu0 0.0
  %188 = vmatprep.subr.mxu0 0.0
  %189 = vmatpush1.msra.mxu0 0.0
  %190 = vmatprep.subr.mxu0 0.0
  %191 = vmatpush1.msra.mxu0 0.0
  %192 = vmatprep.subr.mxu0 0.0
  %193 = vmatpush1.msra.mxu0 0.0
  %194 = vmatprep.subr.mxu0 0.0
  %195 = vmatpush1.msra.mxu0 0.0
  %196 = vmatprep.subr.mxu0 0.0
  %197 = vmatpush1.msra.mxu0 0.0
  %198 = vmatprep.subr.mxu0 0.0
  %199 = vmatpush1.msra.mxu0 0.0
  %200 = vmatprep.mubr.f32.mxu0 0.0
  %201 = vmatmul.mubr.f32.gmra.mrb[0].mxu0 %v62
  %v202 = vpop.f32.mrb[0].mxu0
  %v203 = vadd.f32 0.0, %v202
  %v204 = vpop.f32.mrb[0].mxu0
  %v205 = vadd.f32 0.0, %v204
  %206 = vmatprep.mubr.f32.mxu0 0.0
  %207 = vmatmul.mubr.f32.gmra.mrb[0].mxu0 %v65
  %v208 = vpop.f32.mrb[0].mxu0
  %v209 = vadd.f32 0.0, %v208
  %v210 = vpop.f32.mrb[0].mxu0
  %v211 = vadd.f32 0.0, %v210
  %212 = vmatprep.mubr.f32.mxu0 0.0
  %213 = vmatmul.mubr.f32.gmra.mrb[0].mxu0 %v68
  %v214 = vpop.f32.mrb[0].mxu0
  %v215 = vadd.f32 0.0, %v214
  %v216 = vpop.f32.mrb[0].mxu0
  %v217 = vadd.f32 0.0, %v216
  %218 = vmatprep.mubr.f32.mxu0 0.0
  %219 = vmatmul.mubr.f32.gmra.mrb[0].mxu0 %v71
  %v220 = vpop.f32.mrb[0].mxu0
  %v221 = vadd.f32 0.0, %v220
  %v222 = vpop.f32.mrb[0].mxu0
  %v223 = vadd.f32 0.0, %v222
  %224 = vmatprep.mubr.f32.mxu0 0.0
  %225 = vmatmul.mubr.f32.gmra.mrb[0].mxu0 %v74
  %v226 = vpop.f32.mrb[0].mxu0
  %v227 = vadd.f32 0.0, %v226
  %v228 = vpop.f32.mrb[0].mxu0
  %v229 = vadd.f32 0.0, %v228
  %230 = vmatprep.mubr.f32.mxu0 0.0
  %231 = vmatmul.mubr.f32.gmra.mrb[0].mxu0 %v77
  %v232 = vpop.f32.mrb[0].mxu0
  %v233 = vadd.f32 0.0, %v232
  %v234 = vpop.f32.mrb[0].mxu0
  %v235 = vadd.f32 0.0, %v234
  %236 = vmatprep.mubr.f32.mxu0 0.0
  %237 = vmatmul.mubr.f32.gmra.mrb[0].mxu0 %v80
  %v238 = vpop.f32.mrb[0].mxu0
  %v239 = vadd.f32 0.0, %v238
  %v240 = vpop.f32.mrb[0].mxu0
  %v241 = vadd.f32 0.0, %v240
  %242 = vmatprep.mubr.f32.mxu0 0.0
  %243 = vmatmul.mubr.f32.gmra.mrb[0].mxu0 %v83
  %v244 = vpop.f32.mrb[0].mxu0
  %v245 = vadd.f32 0.0, %v244
  %v246 = vpop.f32.mrb[0].mxu0
  %v247 = vadd.f32 0.0, %v246
  %248 = vmatprep.mubr.f32.mxu0 0.0
  %249 = vmatmul.mubr.f32.gmra.mrb[0].mxu0 %v86
  %v250 = vpop.f32.mrb[0].mxu0
  %v251 = vadd.f32 0.0, %v250
  %v252 = vpop.f32.mrb[0].mxu0
  %v253 = vadd.f32 0.0, %v252
  %254 = vmatprep.mubr.f32.mxu0 0.0
  %255 = vmatmul.mubr.f32.gmra.mrb[0].mxu0 %v89
  %v256 = vpop.f32.mrb[0].mxu0
  %v257 = vadd.f32 0.0, %v256
  %v258 = vpop.f32.mrb[0].mxu0
  %v259 = vadd.f32 0.0, %v258
  %260 = vmatprep.mubr.f32.mxu0 0.0
  %261 = vmatmul.mubr.f32.gmra.mrb[0].mxu0 %v92
  %v262 = vpop.f32.mrb[0].mxu0
  %v263 = vadd.f32 0.0, %v262
  %v264 = vpop.f32.mrb[0].mxu0
  %v265 = vadd.f32 0.0, %v264
  %266 = vmatprep.mubr.f32.mxu0 0.0
  %267 = vmatmul.mubr.f32.gmra.mrb[0].mxu0 %v95
  %v268 = vpop.f32.mrb[0].mxu0
  %v269 = vadd.f32 0.0, %v268
  %v270 = vpop.f32.mrb[0].mxu0
  %v271 = vadd.f32 0.0, %v270
  %272 = vmatprep.mubr.f32.mxu0 0.0
  %273 = vmatmul.mubr.f32.gmra.mrb[0].mxu0 %v98
  %v274 = vpop.f32.mrb[0].mxu0
  %v275 = vadd.f32 0.0, %v274
  %v276 = vpop.f32.mrb[0].mxu0
  %v277 = vadd.f32 0.0, %v276
  %278 = vmatprep.mubr.f32.mxu0 0.0
  %279 = vmatmul.mubr.f32.gmra.mrb[0].mxu0 %v101
  %v280 = vpop.f32.mrb[0].mxu0
  %v281 = vadd.f32 0.0, %v280
  %v282 = vpop.f32.mrb[0].mxu0
  %v283 = vadd.f32 0.0, %v282
  %284 = vmatprep.mubr.f32.mxu0 0.0
  %285 = vmatmul.mubr.f32.gmra.mrb[0].mxu0 %v104
  %v286 = vpop.f32.mrb[0].mxu0
  %v287 = vadd.f32 0.0, %v286
  %v288 = vpop.f32.mrb[0].mxu0
  %v289 = vadd.f32 0.0, %v288
  %290 = vmatprep.mubr.f32.mxu0 0.0
  %291 = vmatmul.mubr.f32.gmra.mrb[0].mxu0 %v107
  %v292 = vpop.f32.mrb[0].mxu0
  %v293 = vadd.f32 0.0, %v292
  %v294 = vpop.f32.mrb[0].mxu0
  %v295 = vadd.f32 0.0, %v294
  %296 = vmatprep.mubr.f32.mxu0 0.0
  %297 = vmatmul.mubr.f32.gmra.mrb[0].mxu0 %v110
  %v298 = vpop.f32.mrb[0].mxu0
  %v299 = vadd.f32 0.0, %v298
  %v300 = vpop.f32.mrb[0].mxu0
  %v301 = vadd.f32 0.0, %v300
  %302 = vmatprep.mubr.f32.mxu0 0.0
  %303 = vmatmul.mubr.f32.gmra.mrb[0].mxu0 %v113
  %v304 = vpop.f32.mrb[0].mxu0
  %v305 = vadd.f32 0.0, %v304
  %v306 = vpop.f32.mrb[0].mxu0
  %v307 = vadd.f32 0.0, %v306
  %308 = vmatprep.mubr.f32.mxu0 0.0
  %309 = vmatmul.mubr.f32.gmra.mrb[0].mxu0 %v116
  %v310 = vpop.f32.mrb[0].mxu0
  %v311 = vadd.f32 0.0, %v310
  %v312 = vpop.f32.mrb[0].mxu0
  %v313 = vadd.f32 0.0, %v312
  %314 = vmatprep.mubr.f32.mxu0 0.0
  %315 = vmatmul.mubr.f32.gmra.mrb[0].mxu0 %v119
  %v316 = vpop.f32.mrb[0].mxu0
  %v317 = vadd.f32 0.0, %v316
  %v318 = vpop.f32.mrb[0].mxu0
  %v319 = vadd.f32 0.0, %v318
  %320 = vmatprep.mubr.f32.mxu0 0.0
  %321 = vmatmul.mubr.f32.gmra.mrb[0].mxu0 %v122
  %v322 = vpop.f32.mrb[0].mxu0
  %v323 = vadd.f32 0.0, %v322
  %v324 = vpop.f32.mrb[0].mxu0
  %v325 = vadd.f32 0.0, %v324
  %326 = vmatprep.mubr.f32.mxu0 0.0
  %327 = vmatmul.mubr.f32.gmra.mrb[0].mxu0 %v125
  %v328 = vpop.f32.mrb[0].mxu0
  %v329 = vadd.f32 0.0, %v328
  %v330 = vpop.f32.mrb[0].mxu0
  %v331 = vadd.f32 0.0, %v330
  %332 = vmatprep.mubr.f32.mxu0 0.0
  %333 = vmatmul.mubr.f32.gmra.mrb[0].mxu0 %v128
  %v334 = vpop.f32.mrb[0].mxu0
  %v335 = vadd.f32 0.0, %v334
  %v336 = vpop.f32.mrb[0].mxu0
  %v337 = vadd.f32 0.0, %v336
  %338 = vmatprep.mubr.f32.mxu0 0.0
  %339 = vmatmul.mubr.f32.gmra.mrb[0].mxu0 %v131
  %v340 = vpop.f32.mrb[0].mxu0
  %v341 = vadd.f32 0.0, %v340
  %v342 = vpop.f32.mrb[0].mxu0
  %v343 = vadd.f32 0.0, %v342
  %344 = vmatprep.mubr.f32.mxu0 0.0
  %345 = vmatmul.mubr.f32.gmra.mrb[0].mxu0 %v134
  %v346 = vpop.f32.mrb[0].mxu0
  %v347 = vadd.f32 0.0, %v346
  %v348 = vpop.f32.mrb[0].mxu0
  %v349 = vadd.f32 0.0, %v348
  %350 = vdwg.mxu0
  %v351 = vpack.c.bf16 %v209, %v203
  %v352 = vpack.c.bf16 %v211, %v205
  %v353 = vpack.c.bf16 %v221, %v215
  %v354 = vpack.c.bf16 %v223, %v217
  %v355 = vpack.c.bf16 %v233, %v227
  %v356 = vpack.c.bf16 %v235, %v229
  %v357 = vpack.c.bf16 %v245, %v239
  %v358 = vpack.c.bf16 %v247, %v241
  %v359 = vpack.c.bf16 %v257, %v251
  %v360 = vpack.c.bf16 %v259, %v253
  %v361 = vpack.c.bf16 %v269, %v263
  %v362 = vpack.c.bf16 %v271, %v265
  %v363 = vpack.c.bf16 %v281, %v275
  %v364 = vpack.c.bf16 %v283, %v277
  %v365 = vpack.c.bf16 %v293, %v287
  %v366 = vpack.c.bf16 %v295, %v289
  %v367 = vpack.c.bf16 %v305, %v299
  %v368 = vpack.c.bf16 %v307, %v301
  %v369 = vpack.c.bf16 %v317, %v311
  %v370 = vpack.c.bf16 %v319, %v313
  %v371 = vpack.c.bf16 %v329, %v323
  %v372 = vpack.c.bf16 %v331, %v325
  %v373 = vpack.c.bf16 %v341, %v335
  %v374 = vpack.c.bf16 %v343, %v337
  %v375 = vpack.c.bf16 %v347, %v347
  %v376 = vpack.c.bf16 %v349, %v349
  %v403 = vunpack.c.l.b16 %v351
  %v404 = vunpack.c.l.b16 %v352
  %v405 = vunpack.c.h.b16 %v351
  %v406 = vunpack.c.h.b16 %v352
  %v407 = vunpack.c.l.b16 %v353
  %v408 = vunpack.c.l.b16 %v354
  %v409 = vunpack.c.h.b16 %v353
  %v410 = vunpack.c.h.b16 %v354
  %v411 = vunpack.c.l.b16 %v355
  %v412 = vunpack.c.l.b16 %v356
  %v413 = vunpack.c.h.b16 %v355
  %v414 = vunpack.c.h.b16 %v356
  %v415 = vunpack.c.l.b16 %v357
  %v416 = vunpack.c.l.b16 %v358
  %v417 = vunpack.c.h.b16 %v357
  %v418 = vunpack.c.h.b16 %v358
  %v419 = vunpack.c.l.b16 %v359
  %v420 = vunpack.c.l.b16 %v360
  %v421 = vunpack.c.h.b16 %v359
  %v422 = vunpack.c.h.b16 %v360
  %v423 = vunpack.c.l.b16 %v361
  %v424 = vunpack.c.l.b16 %v362
  %v425 = vunpack.c.h.b16 %v361
  %v426 = vunpack.c.h.b16 %v362
  %v427 = vunpack.c.l.b16 %v363
  %v428 = vunpack.c.l.b16 %v364
  %v429 = vunpack.c.h.b16 %v363
  %v430 = vunpack.c.h.b16 %v364
  %v431 = vunpack.c.l.b16 %v365
  %v432 = vunpack.c.l.b16 %v366
  %v433 = vunpack.c.h.b16 %v365
  %v434 = vunpack.c.h.b16 %v366
  %v435 = vunpack.c.l.b16 %v367
  %v436 = vunpack.c.l.b16 %v368
  %v437 = vunpack.c.h.b16 %v367
  %v438 = vunpack.c.h.b16 %v368
  %v439 = vunpack.c.l.b16 %v369
  %v440 = vunpack.c.l.b16 %v370
  %v441 = vunpack.c.h.b16 %v369
  %v442 = vunpack.c.h.b16 %v370
  %v443 = vunpack.c.l.b16 %v371
  %v444 = vunpack.c.l.b16 %v372
  %v445 = vunpack.c.h.b16 %v371
  %v446 = vunpack.c.h.b16 %v372
  %v447 = vunpack.c.l.b16 %v373
  %v448 = vunpack.c.l.b16 %v374
  %v449 = vunpack.c.h.b16 %v373
  %v450 = vunpack.c.h.b16 %v374
  %v451 = vunpack.c.l.b16 %v375
  %v452 = vunpack.c.l.b16 %v376
  %v453 = vpack.c.b16 %v404, %v403
  %v454 = vpack.c.b16 %v406, %v405
  %v455 = vpack.c.b16 %v408, %v407
  %v456 = vpack.c.b16 %v410, %v409
  %v457 = vpack.c.b16 %v412, %v411
  %v458 = vpack.c.b16 %v414, %v413
  %v459 = vpack.c.b16 %v416, %v415
  %v460 = vpack.c.b16 %v418, %v417
  %v461 = vpack.c.b16 %v420, %v419
  %v462 = vpack.c.b16 %v422, %v421
  %v463 = vpack.c.b16 %v424, %v423
  %v464 = vpack.c.b16 %v426, %v425
  %v465 = vpack.c.b16 %v428, %v427
  %v466 = vpack.c.b16 %v430, %v429
  %v467 = vpack.c.b16 %v432, %v431
  %v468 = vpack.c.b16 %v434, %v433
  %v469 = vpack.c.b16 %v436, %v435
  %v470 = vpack.c.b16 %v438, %v437
  %v471 = vpack.c.b16 %v440, %v439
  %v472 = vpack.c.b16 %v442, %v441
  %v473 = vpack.c.b16 %v444, %v443
  %v474 = vpack.c.b16 %v446, %v445
  %v475 = vpack.c.b16 %v448, %v447
  %v476 = vpack.c.b16 %v450, %v449
  %v477 = vpack.c.b16 %v452, %v451
  %503 = vst [vmem:[%s2] sm:$0xff] %v453
  %504 = vst [vmem:[%s2 + $0x8] sm:$0xff] %v454
  %505 = vst [vmem:[%s2 + $0x10] sm:$0xff] %v455
  %506 = vst [vmem:[%s2 + $0x18] sm:$0xff] %v456
  %507 = vst [vmem:[%s2 + $0x20] sm:$0xff] %v457
  %508 = vst [vmem:[%s2 + $0x28] sm:$0xff] %v458
  %509 = vst [vmem:[%s2 + $0x30] sm:$0xff] %v459
  %510 = vst [vmem:[%s2 + $0x38] sm:$0xff] %v460
  %511 = vst [vmem:[%s2 + $0x40] sm:$0xff] %v461
  %512 = vst [vmem:[%s2 + $0x48] sm:$0xff] %v462
  %513 = vst [vmem:[%s2 + $0x50] sm:$0xff] %v463
  %514 = vst [vmem:[%s2 + $0x58] sm:$0xff] %v464
  %515 = vst [vmem:[%s2 + $0x60] sm:$0xff] %v465
  %516 = vst [vmem:[%s2 + $0x68] sm:$0xff] %v466
  %517 = vst [vmem:[%s2 + $0x70] sm:$0xff] %v467
  %518 = vst [vmem:[%s2 + $0x78] sm:$0xff] %v468
  %519 = vst [vmem:[%s2 + $0x80] sm:$0xff] %v469
  %520 = vst [vmem:[%s2 + $0x88] sm:$0xff] %v470
  %521 = vst [vmem:[%s2 + $0x90] sm:$0xff] %v471
  %522 = vst [vmem:[%s2 + $0x98] sm:$0xff] %v472
  %523 = vst [vmem:[%s2 + $0xa0] sm:$0xff] %v473
  %524 = vst [vmem:[%s2 + $0xa8] sm:$0xff] %v474
  %525 = vst [vmem:[%s2 + $0xb0] sm:$0xff] %v475
  %526 = vst [vmem:[%s2 + $0xb8] sm:$0xff] %v476
  %527 = vst [vmem:[%s2 + $0xc0] sm:$0xff] %v477
  // Predicated region
  $region10: #{hgnn_conv_forward.2} parent=0 // pred_check
    _
  $region11: #{hgnn_conv_forward.2} parent=0 // pred_check_branch
    %529 = sbr.rel (0) target = $region13
  $region12: #{hgnn_conv_forward.2} parent=0 // pred_region
    _
  $region13: #{hgnn_conv_forward.2} parent=0 // pred_fallthru
    _
  // Predicated region
  $region14: #{hgnn_conv_forward.2} parent=0 // pred_check
    _
  $region15: #{hgnn_conv_forward.2} parent=0 // pred_check_branch
    %531 = sbr.rel (0) target = $region17
  $region16: #{hgnn_conv_forward.2} parent=0 // pred_region
    _
  $region17: #{hgnn_conv_forward.2} parent=0 // pred_fallthru
    _

</llo_original>
